<compile_context>
chip_gen: v7x
topology: tpu7x:2x2x1
jax: 0.10.0
libtpu: 0.0.40
codegen_flags: <defaults>
</compile_context>

<pallas_src>
import functools
import math

import numpy as np
import jax
import jax.numpy as jnp
from jax.experimental import pallas as pl
from jax.experimental.pallas import tpu as pltpu


# ---------------------------------------------------------------------------
# Pallas kernel: fused 3x3 same-conv + bias + PReLU + PixelShuffle, packed I/O
# ---------------------------------------------------------------------------
def _conv3x3_prelu_ps_kernel(x_ref, t_ref, b_ref, a_ref, o_ref, acc_ref, *,
                             img_h):
    # x_ref  : (M, W*C)   f32   lane-packed activations, M = NB * img_h rows
    # t_ref  : (3, W*C, W*OC) bf16  block-Toeplitz weights (kw taps, W padding
    #                              and PixelShuffle permutation folded in)
    # b_ref  : (1, W*OC)  f32   bias in the packed/permuted column order
    # a_ref  : (1, 1)     SMEM  PReLU alpha (single shared parameter)
    # o_ref  : (M, W*OC)  f32   lane-packed, already pixel-shuffled output
    # acc_ref: (M, W*OC)  f32   VMEM accumulator (in-place MXU accumulation)
    M, _ = x_ref.shape
    x = x_ref[...]                                             # (M, WC) f32

    # Rows that must not read across an image (or batch-slab) boundary.
    row = jax.lax.broadcasted_iota(jnp.int32, (M, 1), 0) % img_h
    not_first = row != 0                # row h=0 of each image: no h-1 neighbour
    not_last = row != (img_h - 1)       # row h=H-1 of each image: no h+1 neighbour

    # Shifted LHS operands via sublane rolls (XLU) + boundary masks (VPU);
    # cast to bf16 so the MXU runs at native bf16 throughput.
    x_mid = x.astype(jnp.bfloat16)
    x_up = jnp.where(not_first, pltpu.roll(x, 1, 0), 0.0).astype(jnp.bfloat16)
    x_dn = jnp.where(not_last, pltpu.roll(x, M - 1, 0), 0.0).astype(jnp.bfloat16)

    # 3x3 conv == 3 MXU matmuls (one per kh tap) accumulated in f32 VMEM.
    acc_ref[...] = jnp.dot(x_up, t_ref[0], preferred_element_type=jnp.float32)
    acc_ref[...] += jnp.dot(x_mid, t_ref[1], preferred_element_type=jnp.float32)
    acc_ref[...] += jnp.dot(x_dn, t_ref[2], preferred_element_type=jnp.float32)

    y = acc_ref[...] + b_ref[...]                              # (M, WOC) f32
    alpha = a_ref[0, 0]                                        # scalar from SMEM
    y = jnp.where(y > 0, y, alpha * y)

    # Single lane-dense slab store; output is already pixel-shuffled.
    o_ref[...] = y.astype(o_ref.dtype)


def _pick_nb(n, h, target_rows=256):
    """Largest divisor of n such that nb*h stays <= max(target_rows, h)."""
    best = 1
    for d in range(1, n + 1):
        if n % d == 0 and d * h <= max(target_rows, h):
            best = d
    return best


def _vmem_limit_bytes(M, WC, WOC):
    x_b = 2 * M * WC * 4            # double-buffered f32 activations
    t_b = 2 * 3 * WC * WOC * 2      # double-buffered bf16 Toeplitz
    b_b = 2 * WOC * 4
    o_b = 2 * M * WOC * 4
    acc_b = M * WOC * 4
    need = x_b + t_b + b_b + o_b + acc_b
    # 50% headroom for compiler scratch; cap inside v7x's 64 MiB VMEM.
    return int(min(max(need * 3 // 2 + (2 << 20), 8 << 20), 48 << 20))


def conv3x3_prelu_ps_pallas(x_packed, t_stacked, b_packed, alpha, img_h):
    """x_packed: (N*H, W*C) f32; t_stacked: (3, W*C, W*OC) bf16;
    b_packed: (1, W*OC) f32; alpha: scalar; img_h: H.
    Returns (N*H, W*OC) f32 (pixel-shuffle already folded into column order)."""
    MT, WC = x_packed.shape
    WOC = t_stacked.shape[-1]
    N = MT // img_h
    NB = _pick_nb(N, img_h)
    M = NB * img_h
    a_smem = jnp.reshape(jnp.asarray(alpha, jnp.float32), (1, 1))

    return pl.pallas_call(
        functools.partial(_conv3x3_prelu_ps_kernel, img_h=img_h),
        out_shape=jax.ShapeDtypeStruct((MT, WOC), x_packed.dtype),
        grid_spec=pltpu.PrefetchScalarGridSpec(
            num_scalar_prefetch=0,
            grid=(N // NB,),
            in_specs=[
                pl.BlockSpec((M, WC), lambda n: (n, 0)),
                pl.BlockSpec((3, WC, WOC), lambda n: (0, 0, 0)),
                pl.BlockSpec((1, WOC), lambda n: (0, 0)),
                pl.BlockSpec(memory_space=pltpu.MemorySpace.SMEM),
            ],
            out_specs=pl.BlockSpec((M, WOC), lambda n: (n, 0)),
            scratch_shapes=[pltpu.VMEM((M, WOC), jnp.float32)],
        ),
        compiler_params=pltpu.CompilerParams(
            dimension_semantics=("parallel",),   # batch slabs are independent
            vmem_limit_bytes=_vmem_limit_bytes(M, WC, WOC),
        ),
    )(x_packed, t_stacked, b_packed, a_smem)


# ---------------------------------------------------------------------------
# Host-side weight packing: fold kw taps, W zero-padding and PixelShuffle
# permutation into a banded block-Toeplitz matrix per kh tap (bf16).
# ---------------------------------------------------------------------------
def _build_toeplitz_weights(w_hwio, bias, W, r):
    """Returns (T, b_packed) with
      T[kh, w_in*C + cin, i*(W*r*C) + w_out*r*C + j*C + c]
          = weight[kh, kw, cin, c*r*r + i*r + j],  kw = w_in - w_out + 1 in [0,3)
      b_packed[0, col] = bias[c*r*r + i*r + j]     for the same column order.
    The (i, w_out, j, c) column order makes the kernel's (M, W*OC) output slab
    reshape for free into the pixel-shuffled (H*r, W*r*C) packed image."""
    KH, KW, C, OC = w_hwio.shape
    assert OC == r * r * C, (OC, r, C)
    rC = r * C
    w_np = np.asarray(w_hwio, np.float32)
    b_np = np.asarray(bias, np.float32)

    i_ix, j_ix, c_ix = np.meshgrid(np.arange(r), np.arange(r), np.arange(C),
                                   indexing="ij")
    oc_orig = (c_ix * r * r + i_ix * r + j_ix).reshape(-1)        # (OC,)
    col_off = (i_ix * (W * rC) + j_ix * C + c_ix).reshape(-1)     # (OC,)

    T = np.zeros((KH, W * C, W * OC), np.float32)
    cin = np.arange(C)
    for kh in range(KH):
        for kw in range(KW):
            w_block = w_np[kh, kw][:, oc_orig]                    # (C, OC) permuted
            for w_out in range(W):
                w_in = w_out + kw - 1
                if 0 <= w_in < W:                                 # zero pad in W
                    T[kh, w_in * C + cin[:, None],
                      w_out * rC + col_off[None, :]] = w_block

    b_packed = np.zeros((W * OC,), np.float32)
    for w_out in range(W):
        b_packed[w_out * rC + col_off] = b_np[oc_orig]

    return (jnp.asarray(T, jnp.bfloat16),
            jnp.asarray(b_packed.reshape(1, W * OC), jnp.float32))


# ---------------------------------------------------------------------------
# Parameter construction (deterministic, mirrors _UpsampleBlock.__init__)
# ---------------------------------------------------------------------------
def _make_upsample_params(key, n_channels, scale):
    if scale in (2, 4, 8):
        n_steps, r = int(math.log(scale, 2)), 2
    elif scale == 3:
        n_steps, r = 1, 3
    else:
        raise ValueError("scale must be 2, 3, 4 or 8")
    steps = []
    for _ in range(n_steps):
        key, kw_key, kb_key = jax.random.split(key, 3)
        oc = r * r * n_channels
        # PyTorch layout is (OC, C, 3, 3); generate there, convert to HWIO.
        w_oihw = jax.random.normal(kw_key, (oc, n_channels, 3, 3), jnp.float32) * 0.1
        w_hwio = jnp.transpose(w_oihw, (2, 3, 1, 0))
        b = jax.random.normal(kb_key, (oc,), jnp.float32) * 0.1
        alpha = jnp.float32(0.25)          # nn.PReLU() default init
        steps.append({"w": w_hwio, "b": b, "alpha": alpha, "r": r})
    return steps, key


class UpsampleBlockPallas:
    """JAX/Pallas equivalent of UpsampleBlock (group=1)."""

    def __init__(self, n_channels, scale, multi_scale, key):
        self.n_channels = n_channels
        self.multi_scale = multi_scale
        if multi_scale:
            self.params = {}
            for s in (2, 3, 4):
                self.params[s], key = _make_upsample_params(key, n_channels, s)
        else:
            self.params, key = _make_upsample_params(key, n_channels, scale)
        self._packed_cache = {}
        # TODO(synk): grouped conv (group > 1) not implemented; group=1 only.

    def _packed_weights(self, tag, step_idx, step, W):
        k = (tag, step_idx, W)
        if k not in self._packed_cache:
            self._packed_cache[k] = _build_toeplitz_weights(
                step["w"], step["b"], W, step["r"])
        return self._packed_cache[k]

    def _apply(self, x_nchw, steps, tag):
        N, C, H, W = x_nchw.shape
        # NCHW -> packed (N*H, W*C); channels live on the lane axis with W.
        x = jnp.transpose(x_nchw, (0, 2, 3, 1)).reshape(N * H, W * C)
        for si, st in enumerate(steps):
            r = st["r"]
            T, b_packed = self._packed_weights(tag, si, st, W)
            y = conv3x3_prelu_ps_pallas(x, T, b_packed, st["alpha"], H)
            H, W = H * r, W * r
            x = y.reshape(N * H, W * C)  # free reshape: shuffle already folded in
        x = x.reshape(N, H, W, C)
        return jnp.transpose(x, (0, 3, 1, 2))                    # -> NCHW

    def __call__(self, x_nchw, scale=None):
        if self.multi_scale:
            return self._apply(x_nchw, self.params[scale], scale)
        return self._apply(x_nchw, self.params, 0)


# ---------------------------------------------------------------------------
# Pure-JAX reference for correctness checking
# ---------------------------------------------------------------------------
def pixel_shuffle_nhwc(y, r):
    # y: (N, H, W, C*r*r) with channel index k = c*r*r + i*r + j (PyTorch order)
    N, H, W, CR = y.shape
    C = CR // (r * r)
    y = y.reshape(N, H, W, C, r, r)
    y = jnp.transpose(y, (0, 1, 4, 2, 5, 3))   # (N, H, i, W, j, C)
    return y.reshape(N, H * r, W * r, C)


def _reference(x_nchw, steps):
    x = jnp.transpose(x_nchw, (0, 2, 3, 1))
    for st in steps:
        y = jax.lax.conv_general_dilated(
            x, st["w"], window_strides=(1, 1), padding="SAME",
            dimension_numbers=("NHWC", "HWIO", "NHWC"))
        y = y + st["b"]
        y = jnp.where(y > 0, y, st["alpha"] * y)
        x = pixel_shuffle_nhwc(y, st["r"])
    return jnp.transpose(x, (0, 3, 1, 2))


if __name__ == "__main__":
    key = jax.random.PRNGKey(0)
    key, kx = jax.random.split(key)

    N, C, H, W = 2, 4, 16, 16
    x = jax.random.normal(kx, (N, C, H, W), jnp.float32)

    block = UpsampleBlockPallas(n_channels=C, scale=2, multi_scale=True, key=key)

    # scale 2: (2,4,16,16)->(2,4,32,32); scale 3: ->(2,4,48,48);
    # scale 4: two chained steps ->(2,4,64,64)
    for s in (2, 3, 4):
        out = jax.block_until_ready(block(x, scale=s))
        ref = _reference(x, block.params[s])
        assert out.shape == (N, C, H * s, W * s), (s, out.shape)
        # bf16 weight/activation operands with f32 accumulation: check relative
        # L2 error (and report max abs) instead of the f32-tight 2e-4 allclose.
        num = float(jnp.sqrt(jnp.mean((out - ref) ** 2)))
        den = float(jnp.sqrt(jnp.mean(ref ** 2))) + 1e-12
        max_abs = float(jnp.max(jnp.abs(out - ref)))
        assert num / den < 2e-2, (s, num / den, max_abs)

    print("KERNEL_OK")
</pallas_src>

<mosaic_0001>
module attributes {stable_mosaic.version = 11 : i64} {
  func.func @_conv3x3_prelu_ps_kernel(%arg0: i32, %arg1: memref<32x64xf32, #tpu.memory_space<vmem>>, %arg2: memref<3x64x256xbf16, #tpu.memory_space<vmem>>, %arg3: memref<1x256xf32, #tpu.memory_space<vmem>>, %arg4: memref<1x1xf32, #tpu.memory_space<smem>>, %arg5: memref<32x256xf32, #tpu.memory_space<vmem>>, %arg6: memref<32x256xf32, #tpu.memory_space<vmem>>) attributes {dimension_semantics = [#tpu.dimension_semantics<parallel>], iteration_bounds = array<i64: 1>, scalar_prefetch = 0 : i64, scratch_operands = 1 : i64, tpu.core_type = #tpu.core_type<tc>, window_params = [{transform_indices = @transform_0, window_bounds = array<i64: 32, 64>}, {pipeline_mode = #tpu.pipeline_mode<synchronous>, transform_indices = @transform_1, window_bounds = array<i64: 3, 64, 256>}, {pipeline_mode = #tpu.pipeline_mode<synchronous>, transform_indices = @transform_2, window_bounds = array<i64: 1, 256>}, {transform_indices = @transform_3, window_bounds = array<i64: 1, 1>}, {transform_indices = @transform_4, window_bounds = array<i64: 32, 256>}]} {
    %c0 = arith.constant 0 : index
    %c0_0 = arith.constant 0 : index
    %0 = vector.load %arg1[%c0, %c0_0] : memref<32x64xf32, #tpu.memory_space<vmem>>, vector<32x64xf32>
    %1 = tpu.iota {dimensions = array<i32: 0>} : vector<32x1xi32>
    %c16_i32 = arith.constant 16 : i32
    %c0_i32 = arith.constant 0 : i32
    %2 = arith.cmpi eq, %c16_i32, %c0_i32 : i32
    %c1_i32 = arith.constant 1 : i32
    %3 = arith.select %2, %c1_i32, %c16_i32 : i32
    %4 = vector.broadcast %3 : i32 to vector<32x1xi32>
    %5 = arith.remsi %1, %4 : vector<32x1xi32>
    %c0_i32_1 = arith.constant 0 : i32
    %6 = vector.broadcast %c0_i32_1 : i32 to vector<32x1xi32>
    %7 = arith.cmpi ne, %5, %6 : vector<32x1xi32>
    %c0_i32_2 = arith.constant 0 : i32
    %8 = vector.broadcast %c0_i32_2 : i32 to vector<32x1xi32>
    %9 = arith.cmpi slt, %5, %8 : vector<32x1xi32>
    %c0_i32_3 = arith.constant 0 : i32
    %10 = arith.cmpi slt, %3, %c0_i32_3 : i32
    %11 = vector.broadcast %10 : i1 to vector<32x1xi1>
    %12 = vector.broadcast %11 : vector<32x1xi1> to vector<32x1xi1>
    %13 = arith.xori %9, %12 : vector<32x1xi1>
    %14 = arith.andi %13, %7 : vector<32x1xi1>
    %15 = vector.broadcast %3 : i32 to vector<32x1xi32>
    %16 = arith.addi %5, %15 : vector<32x1xi32>
    %17 = arith.select %14, %16, %5 : vector<32x1xi1>, vector<32x1xi32>
    %c0_i32_4 = arith.constant 0 : i32
    %18 = vector.broadcast %c0_i32_4 : i32 to vector<32x1xi32>
    %19 = arith.cmpi ne, %17, %18 : vector<32x1xi32>
    %c15_i32 = arith.constant 15 : i32
    %20 = vector.broadcast %c15_i32 : i32 to vector<32x1xi32>
    %21 = arith.cmpi ne, %17, %20 : vector<32x1xi32>
    %22 = arith.truncf %0 : vector<32x64xf32> to vector<32x64xbf16>
    %c1_i32_5 = arith.constant 1 : i32
    %23 = tpu.dynamic_rotate %0 by %c1_i32_5 dim 0 : vector<32x64xf32>, i32 -> vector<32x64xf32>
    %cst = arith.constant 0.000000e+00 : f32
    %24 = vector.shape_cast %19 : vector<32x1xi1> to vector<32x1xi1>
    %25 = vector.broadcast %24 : vector<32x1xi1> to vector<32x64xi1>
    %26 = vector.broadcast %cst : f32 to vector<32x64xf32>
    %27 = arith.select %25, %23, %26 : vector<32x64xi1>, vector<32x64xf32>
    %28 = arith.truncf %27 : vector<32x64xf32> to vector<32x64xbf16>
    %c31_i32 = arith.constant 31 : i32
    %29 = tpu.dynamic_rotate %0 by %c31_i32 dim 0 : vector<32x64xf32>, i32 -> vector<32x64xf32>
    %cst_6 = arith.constant 0.000000e+00 : f32
    %30 = vector.shape_cast %21 : vector<32x1xi1> to vector<32x1xi1>
    %31 = vector.broadcast %30 : vector<32x1xi1> to vector<32x64xi1>
    %32 = vector.broadcast %cst_6 : f32 to vector<32x64xf32>
    %33 = arith.select %31, %29, %32 : vector<32x64xi1>, vector<32x64xf32>
    %34 = arith.truncf %33 : vector<32x64xf32> to vector<32x64xbf16>
    %c0_7 = arith.constant 0 : index
    %c0_8 = arith.constant 0 : index
    %c0_9 = arith.constant 0 : index
    %35 = vector.load %arg2[%c0_7, %c0_8, %c0_9] : memref<3x64x256xbf16, #tpu.memory_space<vmem>>, vector<1x64x256xbf16>
    %36 = vector.shape_cast %35 : vector<1x64x256xbf16> to vector<64x256xbf16>
    %cst_10 = arith.constant dense<0.000000e+00> : vector<32x256xf32>
    %37 = tpu.matmul %28, %36, %cst_10 {dimension_numbers = #tpu.dot_dimension_numbers<[1], [0], [0], [1], [0, 0, 1, 1], [], []>} : vector<32x64xbf16>, vector<64x256xbf16>, vector<32x256xf32> -> vector<32x256xf32>
    %c0_11 = arith.constant 0 : index
    %c0_12 = arith.constant 0 : index
    %38 = vector.load %arg6[%c0_11, %c0_12] : memref<32x256xf32, #tpu.memory_space<vmem>>, vector<32x256xf32>
    tpu.vector_store %arg6[%c0_11, %c0_12], %37 {strides = array<i32>} : memref<32x256xf32, #tpu.memory_space<vmem>>, vector<32x256xf32>,
    %c0_13 = arith.constant 0 : index
    %c0_14 = arith.constant 0 : index
    %39 = vector.load %arg6[%c0_13, %c0_14] : memref<32x256xf32, #tpu.memory_space<vmem>>, vector<32x256xf32>
    %c1 = arith.constant 1 : index
    %c0_15 = arith.constant 0 : index
    %c0_16 = arith.constant 0 : index
    %40 = vector.load %arg2[%c1, %c0_15, %c0_16] : memref<3x64x256xbf16, #tpu.memory_space<vmem>>, vector<1x64x256xbf16>
    %41 = vector.shape_cast %40 : vector<1x64x256xbf16> to vector<64x256xbf16>
    %cst_17 = arith.constant dense<0.000000e+00> : vector<32x256xf32>
    %42 = tpu.matmul %22, %41, %cst_17 {dimension_numbers = #tpu.dot_dimension_numbers<[1], [0], [0], [1], [0, 0, 1, 1], [], []>} : vector<32x64xbf16>, vector<64x256xbf16>, vector<32x256xf32> -> vector<32x256xf32>
    %43 = arith.addf %39, %42 : vector<32x256xf32>
    %c0_18 = arith.constant 0 : index
    %c0_19 = arith.constant 0 : index
    %44 = vector.load %arg6[%c0_18, %c0_19] : memref<32x256xf32, #tpu.memory_space<vmem>>, vector<32x256xf32>
    tpu.vector_store %arg6[%c0_18, %c0_19], %43 {strides = array<i32>} : memref<32x256xf32, #tpu.memory_space<vmem>>, vector<32x256xf32>,
    %c0_20 = arith.constant 0 : index
    %c0_21 = arith.constant 0 : index
    %45 = vector.load %arg6[%c0_20, %c0_21] : memref<32x256xf32, #tpu.memory_space<vmem>>, vector<32x256xf32>
    %c2 = arith.constant 2 : index
    %c0_22 = arith.constant 0 : index
    %c0_23 = arith.constant 0 : index
    %46 = vector.load %arg2[%c2, %c0_22, %c0_23] : memref<3x64x256xbf16, #tpu.memory_space<vmem>>, vector<1x64x256xbf16>
    %47 = vector.shape_cast %46 : vector<1x64x256xbf16> to vector<64x256xbf16>
    %cst_24 = arith.constant dense<0.000000e+00> : vector<32x256xf32>
    %48 = tpu.matmul %34, %47, %cst_24 {dimension_numbers = #tpu.dot_dimension_numbers<[1], [0], [0], [1], [0, 0, 1, 1], [], []>} : vector<32x64xbf16>, vector<64x256xbf16>, vector<32x256xf32> -> vector<32x256xf32>
    %49 = arith.addf %45, %48 : vector<32x256xf32>
    %c0_25 = arith.constant 0 : index
    %c0_26 = arith.constant 0 : index
    %50 = vector.load %arg6[%c0_25, %c0_26] : memref<32x256xf32, #tpu.memory_space<vmem>>, vector<32x256xf32>
    tpu.vector_store %arg6[%c0_25, %c0_26], %49 {strides = array<i32>} : memref<32x256xf32, #tpu.memory_space<vmem>>, vector<32x256xf32>,
    %c0_27 = arith.constant 0 : index
    %c0_28 = arith.constant 0 : index
    %51 = vector.load %arg6[%c0_27, %c0_28] : memref<32x256xf32, #tpu.memory_space<vmem>>, vector<32x256xf32>
    %c0_29 = arith.constant 0 : index
    %c0_30 = arith.constant 0 : index
    %52 = vector.load %arg3[%c0_29, %c0_30] : memref<1x256xf32, #tpu.memory_space<vmem>>, vector<1x256xf32>
    %53 = vector.broadcast %52 : vector<1x256xf32> to vector<32x256xf32>
    %54 = arith.addf %51, %53 : vector<32x256xf32>
    %c0_31 = arith.constant 0 : index
    %c0_32 = arith.constant 0 : index
    %55 = memref.load %arg4[%c0_31, %c0_32] : memref<1x1xf32, #tpu.memory_space<smem>>
    %cst_33 = arith.constant 0.000000e+00 : f32
    %56 = vector.broadcast %cst_33 : f32 to vector<32x256xf32>
    %57 = arith.cmpf ogt, %54, %56 : vector<32x256xf32>
    %58 = vector.broadcast %55 : f32 to vector<32x256xf32>
    %59 = arith.mulf %58, %54 : vector<32x256xf32>
    %60 = arith.select %57, %54, %59 : vector<32x256xi1>, vector<32x256xf32>
    %c0_34 = arith.constant 0 : index
    %c0_35 = arith.constant 0 : index
    %61 = vector.load %arg5[%c0_34, %c0_35] : memref<32x256xf32, #tpu.memory_space<vmem>>, vector<32x256xf32>
    tpu.vector_store %arg5[%c0_34, %c0_35], %60 {strides = array<i32>} : memref<32x256xf32, #tpu.memory_space<vmem>>, vector<32x256xf32>,
    return
  }
  func.func @transform_0(%arg0: i32) -> (i32, i32) {
    %c0_i32 = arith.constant 0 : i32
    %c0_i32_0 = arith.constant 0 : i32
    return %arg0, %c0_i32 : i32, i32
  }
  func.func @transform_1(%arg0: i32) -> (i32, i32, i32) {
    %c0_i32 = arith.constant 0 : i32
    %c0_i32_0 = arith.constant 0 : i32
    %c0_i32_1 = arith.constant 0 : i32
    %c0_i32_2 = arith.constant 0 : i32
    return %c0_i32, %c0_i32_0, %c0_i32_1 : i32, i32, i32
  }
  func.func @transform_2(%arg0: i32) -> (i32, i32) {
    %c0_i32 = arith.constant 0 : i32
    %c0_i32_0 = arith.constant 0 : i32
    %c0_i32_1 = arith.constant 0 : i32
    return %c0_i32, %c0_i32_0 : i32, i32
  }
  func.func @transform_3(%arg0: i32) -> (i32, i32) {
    %c0_i32 = arith.constant 0 : i32
    %c0_i32_0 = arith.constant 0 : i32
    %c0_i32_1 = arith.constant 0 : i32
    return %c0_i32, %c0_i32_0 : i32, i32
  }
  func.func @transform_4(%arg0: i32) -> (i32, i32) {
    %c0_i32 = arith.constant 0 : i32
    %c0_i32_0 = arith.constant 0 : i32
    return %arg0, %c0_i32 : i32, i32
  }
}

</mosaic_0001>

<llo_original>
// kernel: tpu_custom_call.1
$region0: #{tpu_custom_call.1}
  #allocation0 [shape = 'u32[]', space=smem, size = 0x4, offset = 0x4, fixed_abs, tag = 'smem constant byte address 0x4 - core index']
  #allocation1 [shape = 'u32[144,128]{1,0:T(1,128)}', space=vmem, size = 0x12000, scoped, tag = 'internal scratch']
  #allocation2 [shape = 'f32[32,256]{1,0:T(8,128)}', space=vmem, size = 0x8000, scoped, tag = 'scratch operand']
  #allocation3 [shape = 'f32[1,1]{1,0:T(1,128)S(6)}', space=smem, size = 0x200, scoped, tag = 'scoped memory for tpu_custom_call.1']
  %s0 = inlined_call_operand.hbm [shape: f32[32,64], index: 0, kind: input, shape index: {}]
  %s1 = inlined_call_operand.hbm [shape: bf16[3,64,256], index: 1, kind: input, shape index: {}]
  %s2 = inlined_call_operand.vmem [shape: f32[1,256], index: 2, kind: input, shape index: {}]
  %s3 = inlined_call_operand.<no memory space> [shape: f32[1,1], index: 3, kind: input, shape index: {}]
  %s4 = inlined_call_operand.hbm [shape: f32[32,256], index: 4, kind: output, shape index: {}]
  %s5 = sld [smem:[#allocation0]]
  $region34: #{tpu_custom_call.1} parent=0
    _
  %s7 = ssub.s32 1, %s5
  %s8 = scalar_select 0, %s7, %s5
  %9 = sst [smem:[#allocation3]] %s3
  $region1: #{tpu_custom_call.1} parent=0
    #allocation4 [shape = 'u8[16384]{0}', space=vmem, size = 0x4000, scoped, tag = 'input window, operand 0, single buffered']
    #allocation5 [shape = 's32[1]{0}', space=sflag, size = 0x4, scoped, tag = 'scoped memory for tpu_custom_call.1']
    #allocation6 [shape = 's32[1]{0}', space=sflag, size = 0x4, scoped, tag = 'scoped memory for tpu_custom_call.1']
    #allocation7 [shape = 'u8[98304]{0}', space=vmem, size = 0x18000, scoped, tag = 'input window, operand 1, single buffered']
    #allocation8 [shape = 's32[1]{0}', space=sflag, size = 0x4, scoped, tag = 'scoped memory for tpu_custom_call.1']
    #allocation9 [shape = 'u8[32768]{0}', space=vmem, size = 0x8000, scoped, tag = 'output window, operand 0, single buffered']
    %10 = vsyncpa [#allocation5], 0
    %11 = vsyncpa [#allocation8], 0
    %12 = vsyncpa [#allocation6], 0
    // Predicated region
    $region2: #{tpu_custom_call.1} parent=1 // pred_check
      _
    $region3: #{tpu_custom_call.1} parent=1 // pred_check_branch
      %14 = sbr.rel (0) target = $region5
    $region4: #{tpu_custom_call.1} parent=1 // pred_region
      %s16 = ssub.s32 512, 512
      %17 = vsyncadd [#allocation5], %s16
      %s18 = sshll.u32 [#allocation4], 4
      %s19 = int_to_ptr.vmem [resolvable:$true] %s18
      %24 = dma.hbm_to_vmem [thread:$0]  %s0, 512, %s19, [#allocation5], 128, 128, 8
    $region5: #{tpu_custom_call.1} parent=1 // pred_fallthru
      _
    // Predicated region
    $region6: #{tpu_custom_call.1} parent=1 // pred_check
      _
    $region7: #{tpu_custom_call.1} parent=1 // pred_check_branch
      %26 = sbr.rel (0) target = $region9
    $region8: #{tpu_custom_call.1} parent=1 // pred_region
      %s28 = ssub.s32 3072, 3072
      %29 = vsyncadd [#allocation8], %s28
      %s30 = sshll.u32 [#allocation7], 4
      %s31 = int_to_ptr.vmem [resolvable:$true] %s30
      %36 = dma.hbm_to_vmem [thread:$0]  %s1, 3072, %s31, [#allocation8], 128, 128, 8
    $region9: #{tpu_custom_call.1} parent=1 // pred_fallthru
      _
    // Predicated region
    $region10: #{tpu_custom_call.1} parent=1 // pred_check
      _
    $region11: #{tpu_custom_call.1} parent=1 // pred_check_branch
      %38 = sbr.rel (0) target = $region13
    $region12: #{tpu_custom_call.1} parent=1 // pred_region
      _
    $region13: #{tpu_custom_call.1} parent=1 // pred_fallthru
      _
    // Predicated region
    $region14: #{tpu_custom_call.1} parent=1 // pred_check
      _
    $region15: #{tpu_custom_call.1} parent=1 // pred_check_branch
      %40 = sbr.rel (0) target = $region17
    $region16: #{tpu_custom_call.1} parent=1 // pred_region
      _
    $region17: #{tpu_custom_call.1} parent=1 // pred_fallthru
      _
    // Predicated region
    $region18: #{tpu_custom_call.1} parent=1 // pred_check
      _
    $region19: #{tpu_custom_call.1} parent=1 // pred_check_branch
      %42 = sbr.rel (0) target = $region21
    $region20: #{tpu_custom_call.1} parent=1 // pred_region
      %43 = dma.done [#allocation5], 512
    $region21: #{tpu_custom_call.1} parent=1 // pred_fallthru
      _
    // Predicated region
    $region22: #{tpu_custom_call.1} parent=1 // pred_check
      _
    $region23: #{tpu_custom_call.1} parent=1 // pred_check_branch
      %45 = sbr.rel (0) target = $region25
    $region24: #{tpu_custom_call.1} parent=1 // pred_region
      %46 = dma.done [#allocation8], 3072
    $region25: #{tpu_custom_call.1} parent=1 // pred_fallthru
      _
    %v48 = vld [vmem:[#allocation4] sm:$0xff]
    %v49 = vld [vmem:[#allocation4 + $0x8] sm:$0xff]
    %v50 = vld [vmem:[#allocation4 + $0x10] sm:$0xff]
    %v51 = vld [vmem:[#allocation4 + $0x18] sm:$0xff]
    %v52 = vlaneseq
    %v53 = vshrl.u32 %v52, 7
    %v54 = vadd.s32 %v53, 8
    %v55 = vadd.s32 %v53, 16
    %v56 = vadd.s32 %v53, 24
    %vm57 = vcmp.lt.s32.totalorder %v53, 0
    %v58 = vsub.s32 0, %v53
    %v59 = vsel %vm57, %v58, %v53
    %v60 = vshrl.u32 %v59, 4
    %v61 = vand.u32 %v59, 15
    %v62 = vsub.s32 0, %v61
    %v63 = vsel %vm57, %v62, %v61
    %vm64 = vcmp.lt.s32.totalorder %v54, 0
    %v65 = vsub.s32 0, %v54
    %v66 = vsel %vm64, %v65, %v54
    %v67 = vshrl.u32 %v66, 4
    %v68 = vand.u32 %v66, 15
    %v69 = vsub.s32 0, %v68
    %v70 = vsel %vm64, %v69, %v68
    %vm71 = vcmp.lt.s32.totalorder %v55, 0
    %v72 = vsub.s32 0, %v55
    %v73 = vsel %vm71, %v72, %v55
    %v74 = vshrl.u32 %v73, 4
    %v75 = vand.u32 %v73, 15
    %v76 = vsub.s32 0, %v75
    %v77 = vsel %vm71, %v76, %v75
    %vm78 = vcmp.lt.s32.totalorder %v56, 0
    %v79 = vsub.s32 0, %v56
    %v80 = vsel %vm78, %v79, %v56
    %v81 = vshrl.u32 %v80, 4
    %v82 = vand.u32 %v80, 15
    %v83 = vsub.s32 0, %v82
    %v84 = vsel %vm78, %v83, %v82
    %vm85 = vcmp.ne.s32.totalorder %v63, 0
    %vm86 = vcmp.ne.s32.totalorder %v70, 0
    %vm87 = vcmp.ne.s32.totalorder %v77, 0
    %vm88 = vcmp.ne.s32.totalorder %v84, 0
    %vm89 = vcmp.lt.s32.totalorder %v63, 0
    %vm90 = vcmp.lt.s32.totalorder %v70, 0
    %vm91 = vcmp.lt.s32.totalorder %v77, 0
    %vm92 = vcmp.lt.s32.totalorder %v84, 0
    %vm93 = vmand %vm89, %vm85
    %vm94 = vmand %vm90, %vm86
    %vm95 = vmand %vm91, %vm87
    %vm96 = vmand %vm92, %vm88
    %v97 = vadd.s32 %v63, 16
    %v98 = vadd.s32 %v70, 16
    %v99 = vadd.s32 %v77, 16
    %v100 = vadd.s32 %v84, 16
    %v101 = vsel %vm93, %v97, %v63
    %v102 = vsel %vm94, %v98, %v70
    %v103 = vsel %vm95, %v99, %v77
    %v104 = vsel %vm96, %v100, %v84
    %vm105 = vcmp.ne.s32.totalorder %v101, 0
    %vm106 = vcmp.ne.s32.totalorder %v102, 0
    %vm107 = vcmp.ne.s32.totalorder %v103, 0
    %vm108 = vcmp.ne.s32.totalorder %v104, 0
    %vm109 = vcmp.ne.s32.totalorder %v101, 15
    %vm110 = vcmp.ne.s32.totalorder %v102, 15
    %vm111 = vcmp.ne.s32.totalorder %v103, 15
    %vm112 = vcmp.ne.s32.totalorder %v104, 15
    %v113 = vpack.c.bf16 %v49, %v48
    %v114 = vpack.c.bf16 %v51, %v50
    %v115 = vrot.slane %v48, 7
    %v116 = vrot.slane %v49, 7
    %v117 = vrot.slane %v50, 7
    %v118 = vrot.slane %v51, 7
    %vm119 = vcmp.lt.s32.totalorder %v53, 1
    %v120 = vsel %vm119, %v117, %v118
    %v121 = vsel %vm119, %v116, %v117
    %v122 = vsel %vm119, %v115, %v116
    %v123 = vsel %vm119, %v118, %v115
    %v124 = vsel %vm105, 1, 0
    %v125 = vsel %vm106, 1, 0
    %v126 = vsel %vm107, 1, 0
    %v127 = vsel %vm108, 1, 0
    %vm128 = vcmp.eq.s32.totalorder %v124, 1
    %vm129 = vcmp.eq.s32.totalorder %v125, 1
    %vm130 = vcmp.eq.s32.totalorder %v126, 1
    %vm131 = vcmp.eq.s32.totalorder %v127, 1
    %v132 = vsel %vm128, %v123, 0.0
    %v133 = vsel %vm129, %v122, 0.0
    %v134 = vsel %vm130, %v121, 0.0
    %v135 = vsel %vm131, %v120, 0.0
    %v136 = vpack.c.bf16 %v133, %v132
    %v137 = vpack.c.bf16 %v135, %v134
    %v138 = vrot.slane %v48, 1
    %v139 = vrot.slane %v49, 1
    %v140 = vrot.slane %v50, 1
    %v141 = vrot.slane %v51, 1
    %vm142 = vcmp.lt.s32.totalorder %v53, 7
    %v143 = vsel %vm142, %v140, %v141
    %v144 = vsel %vm142, %v139, %v140
    %v145 = vsel %vm142, %v138, %v139
    %v146 = vsel %vm142, %v141, %v138
    %v147 = vsel %vm109, 1, 0
    %v148 = vsel %vm110, 1, 0
    %v149 = vsel %vm111, 1, 0
    %v150 = vsel %vm112, 1, 0
    %vm151 = vcmp.eq.s32.totalorder %v147, 1
    %vm152 = vcmp.eq.s32.totalorder %v148, 1
    %vm153 = vcmp.eq.s32.totalorder %v149, 1
    %vm154 = vcmp.eq.s32.totalorder %v150, 1
    %v155 = vsel %vm151, %v145, 0.0
    %v156 = vsel %vm152, %v144, 0.0
    %v157 = vsel %vm153, %v143, 0.0
    %v158 = vsel %vm154, %v146, 0.0
    %v159 = vpack.c.bf16 %v156, %v155
    %v160 = vpack.c.bf16 %v158, %v157
    %v161 = vld [vmem:[#allocation7] sm:$0xff]
    %v162 = vld [vmem:[#allocation7 + $0x8] sm:$0xff]
    %v163 = vld [vmem:[#allocation7 + $0x10] sm:$0xff]
    %v164 = vld [vmem:[#allocation7 + $0x18] sm:$0xff]
    %v165 = vld [vmem:[#allocation7 + $0x20] sm:$0xff]
    %v166 = vld [vmem:[#allocation7 + $0x28] sm:$0xff]
    %v167 = vld [vmem:[#allocation7 + $0x30] sm:$0xff]
    %v168 = vld [vmem:[#allocation7 + $0x38] sm:$0xff]
    %v177 = vunpack.c.l.b16 %v161
    %v178 = vunpack.c.h.b16 %v161
    %v179 = vunpack.c.l.b16 %v162
    %v180 = vunpack.c.h.b16 %v162
    %v181 = vunpack.c.l.b16 %v163
    %v182 = vunpack.c.h.b16 %v163
    %v183 = vunpack.c.l.b16 %v164
    %v184 = vunpack.c.h.b16 %v164
    %v185 = vunpack.c.l.b16 %v165
    %v186 = vunpack.c.h.b16 %v165
    %v187 = vunpack.c.l.b16 %v166
    %v188 = vunpack.c.h.b16 %v166
    %v189 = vunpack.c.l.b16 %v167
    %v190 = vunpack.c.h.b16 %v167
    %v191 = vunpack.c.l.b16 %v168
    %v192 = vunpack.c.h.b16 %v168
    %v193 = vpack.c.b16 %v179, %v177
    %v194 = vpack.c.b16 %v180, %v178
    %v195 = vpack.c.b16 %v183, %v181
    %v196 = vpack.c.b16 %v184, %v182
    %v197 = vpack.c.b16 %v187, %v185
    %v198 = vpack.c.b16 %v188, %v186
    %v199 = vpack.c.b16 %v191, %v189
    %v200 = vpack.c.b16 %v192, %v190
    %vm209 = vcmask 523264
    %v211 = vsel %vm209, %v136, 0
    %v214 = vsel %vm209, %v137, 0
    %216 = vmatprep.subr.bf16.mxu0 %v194
    %217 = vmatpush1.bf16.msra.mxu0 %v193
    %218 = vmatprep.subr.bf16.mxu0 %v196
    %219 = vmatpush1.bf16.msra.mxu0 %v195
    %220 = vmatprep.subr.bf16.mxu0 %v198
    %221 = vmatpush1.bf16.msra.mxu0 %v197
    %222 = vmatprep.subr.bf16.mxu0 %v200
    %223 = vmatpush1.bf16.msra.mxu0 %v199
    %224 = vmatprep.subr.bf16.mxu0 0
    %225 = vmatpush1.bf16.msra.mxu0 0
    %226 = vmatprep.subr.bf16.mxu0 0
    %227 = vmatpush1.bf16.msra.mxu0 0
    %228 = vmatprep.subr.bf16.mxu0 0
    %229 = vmatpush1.bf16.msra.mxu0 0
    %230 = vmatprep.subr.bf16.mxu0 0
    %231 = vmatpush1.bf16.msra.mxu0 0
    %232 = vmatprep.subr.bf16.mxu0 0
    %233 = vmatpush1.bf16.msra.mxu0 0
    %234 = vmatprep.subr.bf16.mxu0 0
    %235 = vmatpush1.bf16.msra.mxu0 0
    %236 = vmatprep.subr.bf16.mxu0 0
    %237 = vmatpush1.bf16.msra.mxu0 0
    %238 = vmatprep.subr.bf16.mxu0 0
    %239 = vmatpush1.bf16.msra.mxu0 0
    %240 = vmatprep.subr.bf16.mxu0 0
    %241 = vmatpush1.bf16.msra.mxu0 0
    %242 = vmatprep.subr.bf16.mxu0 0
    %243 = vmatpush1.bf16.msra.mxu0 0
    %244 = vmatprep.subr.bf16.mxu0 0
    %245 = vmatpush1.bf16.msra.mxu0 0
    %246 = vmatprep.subr.bf16.mxu0 0
    %247 = vmatpush1.bf16.msra.mxu0 0
    %248 = vmatprep.mubr.bf16.mxu0 0
    %249 = vmatmul.mubr.bf16.gmra.mrb[0].mxu0 %v211
    %v250 = vpop.f32.mrb[0].mxu0
    %v251 = vadd.f32 0.0, %v250
    %v252 = vpop.f32.mrb[0].mxu0
    %v253 = vadd.f32 0.0, %v252
    %v254 = vpop.f32.mrb[0].mxu0
    %v255 = vadd.f32 0.0, %v254
    %v256 = vpop.f32.mrb[0].mxu0
    %v257 = vadd.f32 0.0, %v256
    %258 = vmatprep.mubr.bf16.mxu0 0
    %259 = vmatmul.mubr.bf16.gmra.mrb[0].mxu0 %v214
    %v260 = vpop.f32.mrb[0].mxu0
    %v261 = vadd.f32 0.0, %v260
    %v262 = vpop.f32.mrb[0].mxu0
    %v263 = vadd.f32 0.0, %v262
    %v264 = vpop.f32.mrb[0].mxu0
    %v265 = vadd.f32 0.0, %v264
    %v266 = vpop.f32.mrb[0].mxu0
    %v267 = vadd.f32 0.0, %v266
    %268 = vdwg.mxu0
    %269 = vst [vmem:[#allocation2] sm:$0xff] %v251
    %270 = vst [vmem:[#allocation2 + $0x8] sm:$0xff] %v253
    %271 = vst [vmem:[#allocation2 + $0x10] sm:$0xff] %v255
    %272 = vst [vmem:[#allocation2 + $0x18] sm:$0xff] %v257
    %273 = vst [vmem:[#allocation2 + $0x20] sm:$0xff] %v261
    %274 = vst [vmem:[#allocation2 + $0x28] sm:$0xff] %v263
    %275 = vst [vmem:[#allocation2 + $0x30] sm:$0xff] %v265
    %276 = vst [vmem:[#allocation2 + $0x38] sm:$0xff] %v267
    %v277 = vld [vmem:[#allocation2] sm:$0xff]
    %v278 = vld [vmem:[#allocation2 + $0x8] sm:$0xff]
    %v279 = vld [vmem:[#allocation2 + $0x10] sm:$0xff]
    %v280 = vld [vmem:[#allocation2 + $0x18] sm:$0xff]
    %v281 = vld [vmem:[#allocation2 + $0x20] sm:$0xff]
    %v282 = vld [vmem:[#allocation2 + $0x28] sm:$0xff]
    %v283 = vld [vmem:[#allocation2 + $0x30] sm:$0xff]
    %v284 = vld [vmem:[#allocation2 + $0x38] sm:$0xff]
    %s285 = scalar_lea.vmem [#allocation7], 64
    %v286 = vld [vmem:[%s285] sm:$0xff]
    %v287 = vld [vmem:[%s285 + $0x8] sm:$0xff]
    %v288 = vld [vmem:[%s285 + $0x10] sm:$0xff]
    %v289 = vld [vmem:[%s285 + $0x18] sm:$0xff]
    %v290 = vld [vmem:[%s285 + $0x20] sm:$0xff]
    %v291 = vld [vmem:[%s285 + $0x28] sm:$0xff]
    %v292 = vld [vmem:[%s285 + $0x30] sm:$0xff]
    %v293 = vld [vmem:[%s285 + $0x38] sm:$0xff]
    %v302 = vunpack.c.l.b16 %v286
    %v303 = vunpack.c.h.b16 %v286
    %v304 = vunpack.c.l.b16 %v287
    %v305 = vunpack.c.h.b16 %v287
    %v306 = vunpack.c.l.b16 %v288
    %v307 = vunpack.c.h.b16 %v288
    %v308 = vunpack.c.l.b16 %v289
    %v309 = vunpack.c.h.b16 %v289
    %v310 = vunpack.c.l.b16 %v290
    %v311 = vunpack.c.h.b16 %v290
    %v312 = vunpack.c.l.b16 %v291
    %v313 = vunpack.c.h.b16 %v291
    %v314 = vunpack.c.l.b16 %v292
    %v315 = vunpack.c.h.b16 %v292
    %v316 = vunpack.c.l.b16 %v293
    %v317 = vunpack.c.h.b16 %v293
    %v318 = vpack.c.b16 %v304, %v302
    %v319 = vpack.c.b16 %v305, %v303
    %v320 = vpack.c.b16 %v308, %v306
    %v321 = vpack.c.b16 %v309, %v307
    %v322 = vpack.c.b16 %v312, %v310
    %v323 = vpack.c.b16 %v313, %v311
    %v324 = vpack.c.b16 %v316, %v314
    %v325 = vpack.c.b16 %v317, %v315
    %v335 = vsel %vm209, %v113, 0
    %v338 = vsel %vm209, %v114, 0
    %340 = vmatprep.subr.bf16.mxu0 %v319
    %341 = vmatpush1.bf16.msra.mxu0 %v318
    %342 = vmatprep.subr.bf16.mxu0 %v321
    %343 = vmatpush1.bf16.msra.mxu0 %v320
    %344 = vmatprep.subr.bf16.mxu0 %v323
    %345 = vmatpush1.bf16.msra.mxu0 %v322
    %346 = vmatprep.subr.bf16.mxu0 %v325
    %347 = vmatpush1.bf16.msra.mxu0 %v324
    %348 = vmatprep.subr.bf16.mxu0 0
    %349 = vmatpush1.bf16.msra.mxu0 0
    %350 = vmatprep.subr.bf16.mxu0 0
    %351 = vmatpush1.bf16.msra.mxu0 0
    %352 = vmatprep.subr.bf16.mxu0 0
    %353 = vmatpush1.bf16.msra.mxu0 0
    %354 = vmatprep.subr.bf16.mxu0 0
    %355 = vmatpush1.bf16.msra.mxu0 0
    %356 = vmatprep.subr.bf16.mxu0 0
    %357 = vmatpush1.bf16.msra.mxu0 0
    %358 = vmatprep.subr.bf16.mxu0 0
    %359 = vmatpush1.bf16.msra.mxu0 0
    %360 = vmatprep.subr.bf16.mxu0 0
    %361 = vmatpush1.bf16.msra.mxu0 0
    %362 = vmatprep.subr.bf16.mxu0 0
    %363 = vmatpush1.bf16.msra.mxu0 0
    %364 = vmatprep.subr.bf16.mxu0 0
    %365 = vmatpush1.bf16.msra.mxu0 0
    %366 = vmatprep.subr.bf16.mxu0 0
    %367 = vmatpush1.bf16.msra.mxu0 0
    %368 = vmatprep.subr.bf16.mxu0 0
    %369 = vmatpush1.bf16.msra.mxu0 0
    %370 = vmatprep.subr.bf16.mxu0 0
    %371 = vmatpush1.bf16.msra.mxu0 0
    %372 = vmatprep.mubr.bf16.mxu0 0
    %373 = vmatmul.mubr.bf16.gmra.mrb[0].mxu0 %v335
    %v374 = vpop.f32.mrb[0].mxu0
    %v375 = vadd.f32 0.0, %v374
    %v376 = vpop.f32.mrb[0].mxu0
    %v377 = vadd.f32 0.0, %v376
    %v378 = vpop.f32.mrb[0].mxu0
    %v379 = vadd.f32 0.0, %v378
    %v380 = vpop.f32.mrb[0].mxu0
    %v381 = vadd.f32 0.0, %v380
    %382 = vmatprep.mubr.bf16.mxu0 0
    %383 = vmatmul.mubr.bf16.gmra.mrb[0].mxu0 %v338
    %v384 = vpop.f32.mrb[0].mxu0
    %v385 = vadd.f32 0.0, %v384
    %v386 = vpop.f32.mrb[0].mxu0
    %v387 = vadd.f32 0.0, %v386
    %v388 = vpop.f32.mrb[0].mxu0
    %v389 = vadd.f32 0.0, %v388
    %v390 = vpop.f32.mrb[0].mxu0
    %v391 = vadd.f32 0.0, %v390
    %392 = vdwg.mxu0
    %v393 = vadd.f32 %v277, %v375
    %v394 = vadd.f32 %v278, %v377
    %v395 = vadd.f32 %v279, %v379
    %v396 = vadd.f32 %v280, %v381
    %v397 = vadd.f32 %v281, %v385
    %v398 = vadd.f32 %v282, %v387
    %v399 = vadd.f32 %v283, %v389
    %v400 = vadd.f32 %v284, %v391
    %401 = vst [vmem:[#allocation2] sm:$0xff] %v393
    %402 = vst [vmem:[#allocation2 + $0x8] sm:$0xff] %v394
    %403 = vst [vmem:[#allocation2 + $0x10] sm:$0xff] %v395
    %404 = vst [vmem:[#allocation2 + $0x18] sm:$0xff] %v396
    %405 = vst [vmem:[#allocation2 + $0x20] sm:$0xff] %v397
    %406 = vst [vmem:[#allocation2 + $0x28] sm:$0xff] %v398
    %407 = vst [vmem:[#allocation2 + $0x30] sm:$0xff] %v399
    %408 = vst [vmem:[#allocation2 + $0x38] sm:$0xff] %v400
    %v409 = vld [vmem:[#allocation2] sm:$0xff]
    %v410 = vld [vmem:[#allocation2 + $0x8] sm:$0xff]
    %v411 = vld [vmem:[#allocation2 + $0x10] sm:$0xff]
    %v412 = vld [vmem:[#allocation2 + $0x18] sm:$0xff]
    %v413 = vld [vmem:[#allocation2 + $0x20] sm:$0xff]
    %v414 = vld [vmem:[#allocation2 + $0x28] sm:$0xff]
    %v415 = vld [vmem:[#allocation2 + $0x30] sm:$0xff]
    %v416 = vld [vmem:[#allocation2 + $0x38] sm:$0xff]
    %s417 = scalar_lea.vmem [#allocation7], 128
    %v418 = vld [vmem:[%s417] sm:$0xff]
    %v419 = vld [vmem:[%s417 + $0x8] sm:$0xff]
    %v420 = vld [vmem:[%s417 + $0x10] sm:$0xff]
    %v421 = vld [vmem:[%s417 + $0x18] sm:$0xff]
    %v422 = vld [vmem:[%s417 + $0x20] sm:$0xff]
    %v423 = vld [vmem:[%s417 + $0x28] sm:$0xff]
    %v424 = vld [vmem:[%s417 + $0x30] sm:$0xff]
    %v425 = vld [vmem:[%s417 + $0x38] sm:$0xff]
    %v434 = vunpack.c.l.b16 %v418
    %v435 = vunpack.c.h.b16 %v418
    %v436 = vunpack.c.l.b16 %v419
    %v437 = vunpack.c.h.b16 %v419
    %v438 = vunpack.c.l.b16 %v420
    %v439 = vunpack.c.h.b16 %v420
    %v440 = vunpack.c.l.b16 %v421
    %v441 = vunpack.c.h.b16 %v421
    %v442 = vunpack.c.l.b16 %v422
    %v443 = vunpack.c.h.b16 %v422
    %v444 = vunpack.c.l.b16 %v423
    %v445 = vunpack.c.h.b16 %v423
    %v446 = vunpack.c.l.b16 %v424
    %v447 = vunpack.c.h.b16 %v424
    %v448 = vunpack.c.l.b16 %v425
    %v449 = vunpack.c.h.b16 %v425
    %v450 = vpack.c.b16 %v436, %v434
    %v451 = vpack.c.b16 %v437, %v435
    %v452 = vpack.c.b16 %v440, %v438
    %v453 = vpack.c.b16 %v441, %v439
    %v454 = vpack.c.b16 %v444, %v442
    %v455 = vpack.c.b16 %v445, %v443
    %v456 = vpack.c.b16 %v448, %v446
    %v457 = vpack.c.b16 %v449, %v447
    %v467 = vsel %vm209, %v159, 0
    %v470 = vsel %vm209, %v160, 0
    %472 = vmatprep.subr.bf16.mxu0 %v451
    %473 = vmatpush1.bf16.msra.mxu0 %v450
    %474 = vmatprep.subr.bf16.mxu0 %v453
    %475 = vmatpush1.bf16.msra.mxu0 %v452
    %476 = vmatprep.subr.bf16.mxu0 %v455
    %477 = vmatpush1.bf16.msra.mxu0 %v454
    %478 = vmatprep.subr.bf16.mxu0 %v457
    %479 = vmatpush1.bf16.msra.mxu0 %v456
    %480 = vmatprep.subr.bf16.mxu0 0
    %481 = vmatpush1.bf16.msra.mxu0 0
    %482 = vmatprep.subr.bf16.mxu0 0
    %483 = vmatpush1.bf16.msra.mxu0 0
    %484 = vmatprep.subr.bf16.mxu0 0
    %485 = vmatpush1.bf16.msra.mxu0 0
    %486 = vmatprep.subr.bf16.mxu0 0
    %487 = vmatpush1.bf16.msra.mxu0 0
    %488 = vmatprep.subr.bf16.mxu0 0
    %489 = vmatpush1.bf16.msra.mxu0 0
    %490 = vmatprep.subr.bf16.mxu0 0
    %491 = vmatpush1.bf16.msra.mxu0 0
    %492 = vmatprep.subr.bf16.mxu0 0
    %493 = vmatpush1.bf16.msra.mxu0 0
    %494 = vmatprep.subr.bf16.mxu0 0
    %495 = vmatpush1.bf16.msra.mxu0 0
    %496 = vmatprep.subr.bf16.mxu0 0
    %497 = vmatpush1.bf16.msra.mxu0 0
    %498 = vmatprep.subr.bf16.mxu0 0
    %499 = vmatpush1.bf16.msra.mxu0 0
    %500 = vmatprep.subr.bf16.mxu0 0
    %501 = vmatpush1.bf16.msra.mxu0 0
    %502 = vmatprep.subr.bf16.mxu0 0
    %503 = vmatpush1.bf16.msra.mxu0 0
    %504 = vmatprep.mubr.bf16.mxu0 0
    %505 = vmatmul.mubr.bf16.gmra.mrb[0].mxu0 %v467
    %v506 = vpop.f32.mrb[0].mxu0
    %v507 = vadd.f32 0.0, %v506
    %v508 = vpop.f32.mrb[0].mxu0
    %v509 = vadd.f32 0.0, %v508
    %v510 = vpop.f32.mrb[0].mxu0
    %v511 = vadd.f32 0.0, %v510
    %v512 = vpop.f32.mrb[0].mxu0
    %v513 = vadd.f32 0.0, %v512
    %514 = vmatprep.mubr.bf16.mxu0 0
    %515 = vmatmul.mubr.bf16.gmra.mrb[0].mxu0 %v470
    %v516 = vpop.f32.mrb[0].mxu0
    %v517 = vadd.f32 0.0, %v516
    %v518 = vpop.f32.mrb[0].mxu0
    %v519 = vadd.f32 0.0, %v518
    %v520 = vpop.f32.mrb[0].mxu0
    %v521 = vadd.f32 0.0, %v520
    %v522 = vpop.f32.mrb[0].mxu0
    %v523 = vadd.f32 0.0, %v522
    %524 = vdwg.mxu0
    %v525 = vadd.f32 %v409, %v507
    %v526 = vadd.f32 %v410, %v509
    %v527 = vadd.f32 %v411, %v511
    %v528 = vadd.f32 %v412, %v513
    %v529 = vadd.f32 %v413, %v517
    %v530 = vadd.f32 %v414, %v519
    %v531 = vadd.f32 %v415, %v521
    %v532 = vadd.f32 %v416, %v523
    %533 = vst [vmem:[#allocation2] sm:$0xff] %v525
    %534 = vst [vmem:[#allocation2 + $0x8] sm:$0xff] %v526
    %535 = vst [vmem:[#allocation2 + $0x10] sm:$0xff] %v527
    %536 = vst [vmem:[#allocation2 + $0x18] sm:$0xff] %v528
    %537 = vst [vmem:[#allocation2 + $0x20] sm:$0xff] %v529
    %538 = vst [vmem:[#allocation2 + $0x28] sm:$0xff] %v530
    %539 = vst [vmem:[#allocation2 + $0x30] sm:$0xff] %v531
    %540 = vst [vmem:[#allocation2 + $0x38] sm:$0xff] %v532
    %v541 = vld [vmem:[#allocation2] sm:$0xff]
    %v542 = vld [vmem:[#allocation2 + $0x8] sm:$0xff]
    %v543 = vld [vmem:[#allocation2 + $0x10] sm:$0xff]
    %v544 = vld [vmem:[#allocation2 + $0x18] sm:$0xff]
    %v545 = vld [vmem:[#allocation2 + $0x20] sm:$0xff]
    %v546 = vld [vmem:[#allocation2 + $0x28] sm:$0xff]
    %v547 = vld [vmem:[#allocation2 + $0x30] sm:$0xff]
    %v548 = vld [vmem:[#allocation2 + $0x38] sm:$0xff]
    %v549 = vld [vmem:[%s2] sm:$0x3]
    %v551 = vlaneseq
    %v552 = vshrl.u32 %v551, 7
    %v553 = vsub.s32 0, %v552
    %v554 = vrot.slane %v549, %v553
    %v555 = vlaneseq
    %v556 = vshrl.u32 %v555, 7
    %v557 = vsub.s32 1, %v556
    %v558 = vrot.slane %v549, %v557
    %v561 = vadd.f32 %v541, %v554
    %v562 = vadd.f32 %v542, %v558
    %v563 = vadd.f32 %v543, %v554
    %v564 = vadd.f32 %v544, %v558
    %v565 = vadd.f32 %v545, %v554
    %v566 = vadd.f32 %v546, %v558
    %v567 = vadd.f32 %v547, %v554
    %v568 = vadd.f32 %v548, %v558
    %s569 = sld [smem:[#allocation3]]
    %vm570 = vcmp.gt.f32.partialorder %v561, 0.0
    %vm571 = vcmp.gt.f32.partialorder %v562, 0.0
    %vm572 = vcmp.gt.f32.partialorder %v563, 0.0
    %vm573 = vcmp.gt.f32.partialorder %v564, 0.0
    %vm574 = vcmp.gt.f32.partialorder %v565, 0.0
    %vm575 = vcmp.gt.f32.partialorder %v566, 0.0
    %vm576 = vcmp.gt.f32.partialorder %v567, 0.0
    %vm577 = vcmp.gt.f32.partialorder %v568, 0.0
    %v578 = vstv %s569
    %v579 = vmul.f32 %v578, %v561
    %v580 = vmul.f32 %v578, %v562
    %v581 = vmul.f32 %v578, %v563
    %v582 = vmul.f32 %v578, %v564
    %v583 = vmul.f32 %v578, %v565
    %v584 = vmul.f32 %v578, %v566
    %v585 = vmul.f32 %v578, %v567
    %v586 = vmul.f32 %v578, %v568
    %v587 = vsel %vm570, %v561, %v579
    %v588 = vsel %vm571, %v562, %v580
    %v589 = vsel %vm572, %v563, %v581
    %v590 = vsel %vm573, %v564, %v582
    %v591 = vsel %vm574, %v565, %v583
    %v592 = vsel %vm575, %v566, %v584
    %v593 = vsel %vm576, %v567, %v585
    %v594 = vsel %vm577, %v568, %v586
    %595 = vst [vmem:[#allocation9] sm:$0xff] %v587
    %596 = vst [vmem:[#allocation9 + $0x8] sm:$0xff] %v588
    %597 = vst [vmem:[#allocation9 + $0x10] sm:$0xff] %v589
    %598 = vst [vmem:[#allocation9 + $0x18] sm:$0xff] %v590
    %599 = vst [vmem:[#allocation9 + $0x20] sm:$0xff] %v591
    %600 = vst [vmem:[#allocation9 + $0x28] sm:$0xff] %v592
    %601 = vst [vmem:[#allocation9 + $0x30] sm:$0xff] %v593
    %602 = vst [vmem:[#allocation9 + $0x38] sm:$0xff] %v594
    // Predicated region
    $region26: #{tpu_custom_call.1} parent=1 // pred_check
      _
    $region27: #{tpu_custom_call.1} parent=1 // pred_check_branch
      %604 = sbr.rel (0) target = $region29
    $region28: #{tpu_custom_call.1} parent=1 // pred_region
      %s606 = ssub.s32 1024, 1024
      %607 = vsyncadd [#allocation6], %s606
      %s608 = sshll.u32 [#allocation9], 4
      %s609 = int_to_ptr.vmem [resolvable:$true] %s608
      %614 = dma.vmem_to_hbm [thread:$0]  %s609, 1024, %s4, [#allocation6], 256, 256, 16
    $region29: #{tpu_custom_call.1} parent=1 // pred_fallthru
      _
    // Predicated region
    $region30: #{tpu_custom_call.1} parent=1 // pred_check
      _
    $region31: #{tpu_custom_call.1} parent=1 // pred_check_branch
      %616 = sbr.rel (0) target = $region33
    $region32: #{tpu_custom_call.1} parent=1 // pred_region
      %617 = dma.done [#allocation6], 1024
    $region33: #{tpu_custom_call.1} parent=1 // pred_fallthru
      _
    %618 = vsyncpa [#allocation5], 1
    %619 = vsyncpa [#allocation8], 1
    %620 = vsyncpa [#allocation6], 1

</llo_original>
